<compile_context>
chip_gen: v7x
topology: tpu7x:2x2x1
jax: 0.10.0
libtpu: 0.0.40
codegen_flags: <defaults>
</compile_context>

<pallas_src>
import functools
import math

import jax
import jax.numpy as jnp
from jax.experimental import pallas as pl
from jax.experimental.pallas import tpu as pltpu


_LANE = 128
_TILE_BYTES = 2 << 20  # 2 MiB per block -> ~8 MiB pipelined (in+out, double-buffered)


def _sublane_pack(dtype) -> int:
    """Minimum sublane multiple for this dtype (8 for f32, 16 for bf16, 32 for i8)."""
    bits = jnp.dtype(dtype).itemsize * 8
    return max(8, 256 // bits)


def _copy_kernel(x_ref, o_ref):
    # Identity copy of the current (row_tile, lanes) VMEM block.
    o_ref[...] = x_ref[...]


def _choose_layout(total: int, pack: int):
    """Pick (rows, lanes): lanes a multiple of 128 (prefer wide), and if
    possible rows a multiple of the dtype sublane pack."""
    fallback = None
    for lanes in (4096, 2048, 1024, 512, 256, 128):
        if total % lanes:
            continue
        rows = total // lanes
        if rows % pack == 0:
            return rows, lanes
        if fallback is None:
            fallback = (rows, lanes)
    return fallback  # None if total is not a multiple of 128


def _choose_row_tile(rows: int, pack: int, lanes: int, itemsize: int) -> int:
    """Largest divisor of `rows` that is a multiple of `pack` and keeps one
    block <= _TILE_BYTES; falls back to full extent (always legal)."""
    budget = max(1, _TILE_BYTES // (lanes * itemsize))
    if rows <= budget:
        return rows
    start = (budget // pack) * pack
    for t in range(start, 0, -pack):
        if rows % t == 0:
            return t
    return rows  # no clean divisor; single full-extent block is still valid


@functools.partial(jax.jit, static_argnums=1)
def pallas_reshape(x: jax.Array, target_shape) -> jax.Array:
    """Equivalent of torch: x.view(x.size(0), *target_shape)."""
    b = x.shape[0]
    n = math.prod(x.shape[1:])
    tgt_n = math.prod(target_shape)
    if n != tgt_n:
        raise ValueError(
            f"cannot view tensor of {x.shape} as (B, {target_shape}): {n} != {tgt_n}"
        )

    total = b * n
    dtype = x.dtype
    itemsize = jnp.dtype(dtype).itemsize
    pack = _sublane_pack(dtype)

    layout = _choose_layout(total, pack) if total >= _LANE else None

    if layout is None:
        # Ragged fallback (element count not a multiple of 128): single-program
        # whole-array copy; block == full array shape so no (8,128) constraint.
        x2d = jnp.reshape(x, (b, n))
        out2d = pl.pallas_call(
            _copy_kernel,
            out_shape=jax.ShapeDtypeStruct((b, n), dtype),
            in_specs=[pl.BlockSpec(memory_space=pltpu.MemorySpace.VMEM)],
            out_specs=pl.BlockSpec(memory_space=pltpu.MemorySpace.VMEM),
            input_output_aliases={0: 0},
        )(x2d)
        return jnp.reshape(out2d, (b, *target_shape))

    rows, lanes = layout
    row_tile = _choose_row_tile(rows, pack, lanes, itemsize)

    # Lane-dense slab; element order is row-major so it matches torch .view on
    # a contiguous tensor (metadata-only reshapes on both sides of the kernel).
    x2d = jnp.reshape(x, (rows, lanes))

    out2d = pl.pallas_call(
        _copy_kernel,
        out_shape=jax.ShapeDtypeStruct((rows, lanes), dtype),
        grid=(rows // row_tile,),
        in_specs=[pl.BlockSpec((row_tile, lanes), lambda i: (i, 0))],
        out_specs=pl.BlockSpec((row_tile, lanes), lambda i: (i, 0)),
        input_output_aliases={0: 0},
        compiler_params=pltpu.CompilerParams(
            dimension_semantics=("parallel",),
        ),
    )(x2d)

    return jnp.reshape(out2d, (b, *target_shape))


if __name__ == "__main__":
    key = jax.random.PRNGKey(0)

    # Input consistent with a conv feature map: NCHW = (2, 4, 16, 16).
    x = jax.random.normal(key, (2, 4, 16, 16), dtype=jnp.float32)

    # Module config: Reshape(shape=(16, 64))  ->  output (B, 16, 64)
    target_shape = (16, 64)

    y = pallas_reshape(x, target_shape)
    y = jax.block_until_ready(y)

    # Reference check against plain-JAX reshape (== torch .view semantics).
    y_ref = jnp.reshape(x, (x.shape[0], *target_shape))
    assert y.shape == (2, 16, 64), y.shape
    assert y.dtype == x.dtype
    assert bool(jnp.array_equal(y, y_ref))

    print("KERNEL_OK")
</pallas_src>

<mosaic_0001>
module attributes {stable_mosaic.version = 11 : i64} {
  func.func @_copy_kernel(%arg0: i32, %arg1: memref<8x256xf32, #tpu.memory_space<vmem>>, %arg2: memref<8x256xf32, #tpu.memory_space<vmem>>) attributes {dimension_semantics = [#tpu.dimension_semantics<parallel>], iteration_bounds = array<i64: 1>, scalar_prefetch = 0 : i64, scratch_operands = 0 : i64, tpu.core_type = #tpu.core_type<tc>, window_params = [{transform_indices = @transform_0, window_bounds = array<i64: 8, 256>}, {transform_indices = @transform_1, window_bounds = array<i64: 8, 256>}]} {
    %c0 = arith.constant 0 : index
    %c0_0 = arith.constant 0 : index
    %0 = vector.load %arg1[%c0, %c0_0] : memref<8x256xf32, #tpu.memory_space<vmem>>, vector<8x256xf32>
    %c0_1 = arith.constant 0 : index
    %c0_2 = arith.constant 0 : index
    %1 = vector.load %arg2[%c0_1, %c0_2] : memref<8x256xf32, #tpu.memory_space<vmem>>, vector<8x256xf32>
    tpu.vector_store %arg2[%c0_1, %c0_2], %0 {strides = array<i32>} : memref<8x256xf32, #tpu.memory_space<vmem>>, vector<8x256xf32>,
    return
  }
  func.func @transform_0(%arg0: i32) -> (i32, i32) {
    %c0_i32 = arith.constant 0 : i32
    %c0_i32_0 = arith.constant 0 : i32
    return %arg0, %c0_i32 : i32, i32
  }
  func.func @transform_1(%arg0: i32) -> (i32, i32) {
    %c0_i32 = arith.constant 0 : i32
    %c0_i32_0 = arith.constant 0 : i32
    return %arg0, %c0_i32 : i32, i32
  }
}

</mosaic_0001>

<llo_original>
// kernel: pallas_reshape.1
$region0: #{pallas_reshape.1}
  #allocation0 [shape = 'u32[]', space=smem, size = 0x4, offset = 0x4, fixed_abs, tag = 'smem constant byte address 0x4 - core index']
  #allocation1 [shape = 'u32[144,128]{1,0:T(1,128)}', space=vmem, size = 0x12000, scoped, tag = 'internal scratch']
  %s0 = inlined_call_operand.vmem [shape: f32[8,256], index: 0, kind: input, shape index: {}, may-alias: {0,1}]
  %s1 = inlined_call_operand.vmem [shape: f32[8,256], index: 1, kind: output, shape index: {}, may-alias: {0,1}]
  %s2 = sld [smem:[#allocation0]]
  $region14: #{pallas_reshape.1} parent=0
    _
  %s4 = ssub.s32 1, %s2
  %s5 = scalar_select 0, %s4, %s2
  // Predicated region
  $region2: #{pallas_reshape.1} parent=0 // pred_check
    _
  $region3: #{pallas_reshape.1} parent=0 // pred_check_branch
    %7 = sbr.rel (0) target = $region5
  $region4: #{pallas_reshape.1} parent=0 // pred_region
    _
  $region5: #{pallas_reshape.1} parent=0 // pred_fallthru
    _
  %v8 = vld [vmem:[%s0] sm:$0xff]
  %v9 = vld [vmem:[%s0 + $0x8] sm:$0xff]
  %10 = vst [vmem:[%s1] sm:$0xff] %v8
  %11 = vst [vmem:[%s1 + $0x8] sm:$0xff] %v9
  // Predicated region
  $region6: #{pallas_reshape.1} parent=0 // pred_check
    _
  $region7: #{pallas_reshape.1} parent=0 // pred_check_branch
    %13 = sbr.rel (0) target = $region9
  $region8: #{pallas_reshape.1} parent=0 // pred_region
    _
  $region9: #{pallas_reshape.1} parent=0 // pred_fallthru
    _
  // Predicated region
  $region10: #{pallas_reshape.1} parent=0 // pred_check
    _
  $region11: #{pallas_reshape.1} parent=0 // pred_check_branch
    %15 = sbr.rel (0) target = $region13
  $region12: #{pallas_reshape.1} parent=0 // pred_region
    _
  $region13: #{pallas_reshape.1} parent=0 // pred_fallthru
    _

</llo_original>
